<compile_context>
chip_gen: v7x
topology: tpu7x:2x2x1
jax: 0.10.0
libtpu: 0.0.40
codegen_flags: <defaults>
</compile_context>

<pallas_src>
import jax
import jax.numpy as jnp
from jax.experimental import pallas as pl
from jax.experimental.pallas import tpu as pltpu

KERNEL_SIZES = (3, 4, 5)
KERNEL_NUMS = (4, 5, 6)

LANE = 128                      # fused conv output lanes (N of the big matmul)
GROUP = 16                      # lanes per tap group (>= sum(KERNEL_NUMS) = 15)
MAX_KS = max(KERNEL_SIZES)      # 5 taps; MAX_KS * GROUP = 80 <= LANE
TOTAL_C = sum(KERNEL_NUMS)      # 15 pooled features
assert TOTAL_C <= GROUP and MAX_KS * GROUP <= LANE


def cnn_kernel(x_ref, w_ref, cb_ref, mask_ref, fw_ref, fb_ref, o_ref):
    # x_ref:    (TB, S, E)  bf16  embedded tokens (batch tile)
    # w_ref:    (E, 128)    bf16  fused conv weight, tap-major 16-lane groups
    # cb_ref:   (1, 128)    f32   conv bias per fused channel (lanes 0..14)
    # mask_ref: (S, 128)    f32   1.0 where time-step t is valid for that lane's branch
    # fw_ref:   (128, 128)  f32   fused fc weight (rows 0..14, cols 0..num_classes-1)
    # fb_ref:   (1, 128)    f32   fc bias (cols 0..num_classes-1)
    # o_ref:    (TB, 128)   f32   lane-padded logits
    TB, S, E = x_ref.shape
    n = TB * S

    # One lane-dense matmul for every tap of every branch.
    x = x_ref[...].reshape(n, E)
    z = jnp.dot(x, w_ref[...], preferred_element_type=jnp.float32)      # (n, 128)

    # Shift-adds: tap k of row r+k lands on lanes [0, GROUP) of row r.
    # Wrapped rows are either multiplied by zero weight columns (taps a branch
    # lacks) or masked out below, so valid positions are exact.
    acc = z
    for k in range(1, MAX_KS):
        shifted = pltpu.roll(z, n - k, axis=0)                # row r <- z[r + k]
        shifted = pltpu.roll(shifted, LANE - GROUP * k, axis=1)
        acc = acc + shifted

    acc = jnp.maximum(acc + cb_ref[...], 0.0)                 # conv bias + ReLU

    # Max over time per batch row; invalid tail steps / pad lanes -> 0 (ReLU >= 0).
    pooled = jnp.max(acc.reshape(TB, S, LANE) * mask_ref[...], axis=1)   # (TB, 128)

    # Fused classifier: one matmul + bias, one unmasked 128-lane-wide store.
    o_ref[...] = (jnp.dot(pooled, fw_ref[...], preferred_element_type=jnp.float32)
                  + fb_ref[...])


@jax.jit
def cnn_forward(words, params):
    B, S = words.shape
    E = params["embed"].shape[1]
    num_classes = params["fb"].shape[1]
    assert S >= MAX_KS, "sequence must be at least as long as the largest kernel"

    # Embedding lookup (plain JAX gather), emitted in bf16 to halve HBM traffic.
    x = jnp.take(params["embed"], words, axis=0).astype(jnp.bfloat16)    # (B, S, E)

    # ---- fuse conv / fc parameters into 128-lane-padded operands (one-time glue) ----
    w_all = jnp.zeros((E, LANE), jnp.float32)
    cb = jnp.zeros((1, LANE), jnp.float32)
    mask = jnp.zeros((S, LANE), jnp.float32)
    fw = jnp.zeros((LANE, LANE), jnp.float32)
    fb = jnp.zeros((1, LANE), jnp.float32).at[0, :num_classes].set(params["fb"][0])

    off = 0
    for ks, cn in zip(KERNEL_SIZES, KERNEL_NUMS):
        w = params[f"w{ks}"]                                   # (ks, E, cn)
        for k in range(ks):
            col = k * GROUP + off
            w_all = w_all.at[:, col:col + cn].set(w[k])
        cb = cb.at[0, off:off + cn].set(params[f"b{ks}"][0])
        mask = mask.at[:S - ks + 1, off:off + cn].set(1.0)     # valid-conv length
        fw = fw.at[off:off + cn, :num_classes].set(params[f"fw{ks}"])
        off += cn
    w_all = w_all.astype(jnp.bfloat16)

    # Batch tile: cap at 8 so double-buffered activation tiles stay tiny even on
    # v7x's 64 MiB VMEM; the grid axis is "parallel" for megacore sharding.
    TB = B if B <= 8 else 8
    grid = (pl.cdiv(B, TB),)

    padded = pl.pallas_call(
        cnn_kernel,
        out_shape=jax.ShapeDtypeStruct((B, LANE), jnp.float32),
        grid_spec=pltpu.PrefetchScalarGridSpec(
            num_scalar_prefetch=0,
            grid=grid,
            in_specs=[
                pl.BlockSpec((TB, S, E), lambda i: (i, 0, 0)),   # batch-tiled activations
                pl.BlockSpec((E, LANE), lambda i: (0, 0)),       # fused conv weight
                pl.BlockSpec((1, LANE), lambda i: (0, 0)),       # conv bias
                pl.BlockSpec((S, LANE), lambda i: (0, 0)),       # validity mask
                pl.BlockSpec((LANE, LANE), lambda i: (0, 0)),    # fused fc weight
                pl.BlockSpec((1, LANE), lambda i: (0, 0)),       # fc bias
            ],
            out_specs=pl.BlockSpec((TB, LANE), lambda i: (i, 0)),
        ),
        compiler_params=pltpu.CompilerParams(
            dimension_semantics=("parallel",)),
    )(x, w_all, cb, mask, fw, fb)

    # Dropout is identity at inference; slice away the lane padding.
    return {"pred": padded[:, :num_classes]}


def cnn_reference(words, params):
    """Straightforward JAX implementation mirroring the torch module (eval mode)."""
    x = jnp.take(params["embed"], words, axis=0).astype(jnp.bfloat16).astype(jnp.float32)
    feats = []
    for ks in KERNEL_SIZES:
        w = params[f"w{ks}"].astype(jnp.bfloat16).astype(jnp.float32)   # (ks, E, C)
        out_len = x.shape[1] - ks + 1
        acc = jnp.zeros((x.shape[0], out_len, w.shape[2]), jnp.float32)
        for k in range(ks):
            acc = acc + jnp.einsum("bse,ec->bsc", x[:, k:k + out_len, :], w[k],
                                   precision=jax.lax.Precision.HIGHEST)
        acc = jnp.maximum(acc + params[f"b{ks}"], 0.0)
        feats.append(jnp.max(acc, axis=1))                              # (B, C)
    feat = jnp.concatenate(feats, axis=1)                               # (B, 15)
    fw = jnp.concatenate([params[f"fw{ks}"] for ks in KERNEL_SIZES], axis=0)
    return jnp.dot(feat, fw, precision=jax.lax.Precision.HIGHEST) + params["fb"]


def make_params(key, vocab_size, embed_dim, num_classes):
    keys = jax.random.split(key, 16)
    params = {
        "embed": 0.1 * jax.random.normal(keys[0], (vocab_size, embed_dim), jnp.float32),
        "fb": 0.01 * jax.random.normal(keys[1], (1, num_classes), jnp.float32),
    }
    for i, (ks, cn) in enumerate(zip(KERNEL_SIZES, KERNEL_NUMS)):
        # conv weight stored as (ks, E, out_c) (torch Conv1d weight is (out_c, E, ks));
        # conv bias as (1, out_c); per-branch fc slice as (out_c, num_classes).
        params[f"w{ks}"] = 0.1 * jax.random.normal(
            keys[2 + 3 * i], (ks, embed_dim, cn), jnp.float32)
        params[f"b{ks}"] = 0.01 * jax.random.normal(
            keys[3 + 3 * i], (1, cn), jnp.float32)
        params[f"fw{ks}"] = 0.1 * jax.random.normal(
            keys[4 + 3 * i], (cn, num_classes), jnp.float32)
    return params


if __name__ == "__main__":
    B, S = 2, 16
    vocab_size, embed_dim, num_classes = 50, 32, 5

    key = jax.random.PRNGKey(0)
    k_params, k_words = jax.random.split(key)
    params = make_params(k_params, vocab_size, embed_dim, num_classes)
    words = jax.random.randint(k_words, (B, S), 0, vocab_size, dtype=jnp.int32)

    out = cnn_forward(words, params)
    pred = jax.block_until_ready(out["pred"])
    assert pred.shape == (B, num_classes), pred.shape

    ref = jax.block_until_ready(cnn_reference(words, params))
    max_err = float(jnp.max(jnp.abs(pred - ref)))
    assert max_err < 5e-3, f"kernel/reference mismatch: {max_err}"
    print("KERNEL_OK")
</pallas_src>

<mosaic_0001>
module attributes {stable_mosaic.version = 11 : i64} {
  func.func @cnn_kernel(%arg0: i32, %arg1: memref<2x16x32xbf16, #tpu.memory_space<vmem>>, %arg2: memref<32x128xbf16, #tpu.memory_space<vmem>>, %arg3: memref<1x128xf32, #tpu.memory_space<vmem>>, %arg4: memref<16x128xf32, #tpu.memory_space<vmem>>, %arg5: memref<128x128xf32, #tpu.memory_space<vmem>>, %arg6: memref<1x128xf32, #tpu.memory_space<vmem>>, %arg7: memref<2x128xf32, #tpu.memory_space<vmem>>) attributes {dimension_semantics = [#tpu.dimension_semantics<parallel>], iteration_bounds = array<i64: 1>, scalar_prefetch = 0 : i64, scratch_operands = 0 : i64, tpu.core_type = #tpu.core_type<tc>, window_params = [{transform_indices = @transform_0, window_bounds = array<i64: 2, 16, 32>}, {pipeline_mode = #tpu.pipeline_mode<synchronous>, transform_indices = @transform_1, window_bounds = array<i64: 32, 128>}, {pipeline_mode = #tpu.pipeline_mode<synchronous>, transform_indices = @transform_2, window_bounds = array<i64: 1, 128>}, {pipeline_mode = #tpu.pipeline_mode<synchronous>, transform_indices = @transform_3, window_bounds = array<i64: 16, 128>}, {pipeline_mode = #tpu.pipeline_mode<synchronous>, transform_indices = @transform_4, window_bounds = array<i64: 128, 128>}, {pipeline_mode = #tpu.pipeline_mode<synchronous>, transform_indices = @transform_5, window_bounds = array<i64: 1, 128>}, {transform_indices = @transform_6, window_bounds = array<i64: 2, 128>}]} {
    %c0 = arith.constant 0 : index
    %c0_0 = arith.constant 0 : index
    %c0_1 = arith.constant 0 : index
    %0 = vector.load %arg1[%c0, %c0_0, %c0_1] : memref<2x16x32xbf16, #tpu.memory_space<vmem>>, vector<2x16x32xbf16>
    %1 = vector.shape_cast %0 : vector<2x16x32xbf16> to vector<32x32xbf16>
    %c0_2 = arith.constant 0 : index
    %c0_3 = arith.constant 0 : index
    %2 = vector.load %arg2[%c0_2, %c0_3] : memref<32x128xbf16, #tpu.memory_space<vmem>>, vector<32x128xbf16>
    %cst = arith.constant dense<0.000000e+00> : vector<32x128xf32>
    %3 = tpu.matmul %1, %2, %cst {dimension_numbers = #tpu.dot_dimension_numbers<[1], [0], [0], [1], [0, 0, 1, 1], [], []>} : vector<32x32xbf16>, vector<32x128xbf16>, vector<32x128xf32> -> vector<32x128xf32>
    %c31_i32 = arith.constant 31 : i32
    %4 = tpu.dynamic_rotate %3 by %c31_i32 dim 0 : vector<32x128xf32>, i32 -> vector<32x128xf32>
    %c112_i32 = arith.constant 112 : i32
    %5 = tpu.dynamic_rotate %4 by %c112_i32 dim 1 : vector<32x128xf32>, i32 -> vector<32x128xf32>
    %6 = arith.addf %3, %5 : vector<32x128xf32>
    %c30_i32 = arith.constant 30 : i32
    %7 = tpu.dynamic_rotate %3 by %c30_i32 dim 0 : vector<32x128xf32>, i32 -> vector<32x128xf32>
    %c96_i32 = arith.constant 96 : i32
    %8 = tpu.dynamic_rotate %7 by %c96_i32 dim 1 : vector<32x128xf32>, i32 -> vector<32x128xf32>
    %9 = arith.addf %6, %8 : vector<32x128xf32>
    %c29_i32 = arith.constant 29 : i32
    %10 = tpu.dynamic_rotate %3 by %c29_i32 dim 0 : vector<32x128xf32>, i32 -> vector<32x128xf32>
    %c80_i32 = arith.constant 80 : i32
    %11 = tpu.dynamic_rotate %10 by %c80_i32 dim 1 : vector<32x128xf32>, i32 -> vector<32x128xf32>
    %12 = arith.addf %9, %11 : vector<32x128xf32>
    %c28_i32 = arith.constant 28 : i32
    %13 = tpu.dynamic_rotate %3 by %c28_i32 dim 0 : vector<32x128xf32>, i32 -> vector<32x128xf32>
    %c64_i32 = arith.constant 64 : i32
    %14 = tpu.dynamic_rotate %13 by %c64_i32 dim 1 : vector<32x128xf32>, i32 -> vector<32x128xf32>
    %15 = arith.addf %12, %14 : vector<32x128xf32>
    %c0_4 = arith.constant 0 : index
    %c0_5 = arith.constant 0 : index
    %16 = vector.load %arg3[%c0_4, %c0_5] : memref<1x128xf32, #tpu.memory_space<vmem>>, vector<1x128xf32>
    %17 = vector.broadcast %16 : vector<1x128xf32> to vector<32x128xf32>
    %18 = arith.addf %15, %17 : vector<32x128xf32>
    %cst_6 = arith.constant 0.000000e+00 : f32
    %19 = vector.broadcast %cst_6 : f32 to vector<32x128xf32>
    %20 = arith.maximumf %18, %19 : vector<32x128xf32>
    %21 = vector.shape_cast %20 : vector<32x128xf32> to vector<2x16x128xf32>
    %c0_7 = arith.constant 0 : index
    %c0_8 = arith.constant 0 : index
    %22 = vector.load %arg4[%c0_7, %c0_8] : memref<16x128xf32, #tpu.memory_space<vmem>>, vector<16x128xf32>
    %23 = vector.shape_cast %22 : vector<16x128xf32> to vector<1x16x128xf32>
    %24 = vector.broadcast %23 : vector<1x16x128xf32> to vector<2x16x128xf32>
    %25 = arith.mulf %21, %24 : vector<2x16x128xf32>
    %cst_9 = arith.constant dense<0xFF800000> : vector<2x128xf32>
    %26 = vector.multi_reduction <maximumf>, %25, %cst_9 [1] : vector<2x16x128xf32> to vector<2x128xf32>
    %c0_10 = arith.constant 0 : index
    %c0_11 = arith.constant 0 : index
    %27 = vector.load %arg5[%c0_10, %c0_11] : memref<128x128xf32, #tpu.memory_space<vmem>>, vector<128x128xf32>
    %cst_12 = arith.constant dense<0.000000e+00> : vector<2x128xf32>
    %28 = tpu.matmul %26, %27, %cst_12 {dimension_numbers = #tpu.dot_dimension_numbers<[1], [0], [0], [1], [0, 0, 1, 1], [], []>} : vector<2x128xf32>, vector<128x128xf32>, vector<2x128xf32> -> vector<2x128xf32>
    %c0_13 = arith.constant 0 : index
    %c0_14 = arith.constant 0 : index
    %29 = vector.load %arg6[%c0_13, %c0_14] : memref<1x128xf32, #tpu.memory_space<vmem>>, vector<1x128xf32>
    %30 = vector.broadcast %29 : vector<1x128xf32> to vector<2x128xf32>
    %31 = arith.addf %28, %30 : vector<2x128xf32>
    %c0_15 = arith.constant 0 : index
    %c0_16 = arith.constant 0 : index
    %32 = vector.load %arg7[%c0_15, %c0_16] : memref<2x128xf32, #tpu.memory_space<vmem>>, vector<2x128xf32>
    tpu.vector_store %arg7[%c0_15, %c0_16], %31 {strides = array<i32>} : memref<2x128xf32, #tpu.memory_space<vmem>>, vector<2x128xf32>,
    return
  }
  func.func @transform_0(%arg0: i32) -> (i32, i32, i32) {
    %c0_i32 = arith.constant 0 : i32
    %c0_i32_0 = arith.constant 0 : i32
    %c0_i32_1 = arith.constant 0 : i32
    return %arg0, %c0_i32, %c0_i32_0 : i32, i32, i32
  }
  func.func @transform_1(%arg0: i32) -> (i32, i32) {
    %c0_i32 = arith.constant 0 : i32
    %c0_i32_0 = arith.constant 0 : i32
    %c0_i32_1 = arith.constant 0 : i32
    return %c0_i32, %c0_i32_0 : i32, i32
  }
  func.func @transform_2(%arg0: i32) -> (i32, i32) {
    %c0_i32 = arith.constant 0 : i32
    %c0_i32_0 = arith.constant 0 : i32
    %c0_i32_1 = arith.constant 0 : i32
    return %c0_i32, %c0_i32_0 : i32, i32
  }
  func.func @transform_3(%arg0: i32) -> (i32, i32) {
    %c0_i32 = arith.constant 0 : i32
    %c0_i32_0 = arith.constant 0 : i32
    %c0_i32_1 = arith.constant 0 : i32
    return %c0_i32, %c0_i32_0 : i32, i32
  }
  func.func @transform_4(%arg0: i32) -> (i32, i32) {
    %c0_i32 = arith.constant 0 : i32
    %c0_i32_0 = arith.constant 0 : i32
    %c0_i32_1 = arith.constant 0 : i32
    return %c0_i32, %c0_i32_0 : i32, i32
  }
  func.func @transform_5(%arg0: i32) -> (i32, i32) {
    %c0_i32 = arith.constant 0 : i32
    %c0_i32_0 = arith.constant 0 : i32
    %c0_i32_1 = arith.constant 0 : i32
    return %c0_i32, %c0_i32_0 : i32, i32
  }
  func.func @transform_6(%arg0: i32) -> (i32, i32) {
    %c0_i32 = arith.constant 0 : i32
    %c0_i32_0 = arith.constant 0 : i32
    return %arg0, %c0_i32 : i32, i32
  }
}

</mosaic_0001>

<llo_original>
// kernel: cnn_forward.1
$region0: #{cnn_forward.1}
  #allocation0 [shape = 'u32[]', space=smem, size = 0x4, offset = 0x4, fixed_abs, tag = 'smem constant byte address 0x4 - core index']
  #allocation1 [shape = 'u32[144,128]{1,0:T(1,128)}', space=vmem, size = 0x12000, scoped, tag = 'internal scratch']
  %s0 = inlined_call_operand.vmem [shape: bf16[2,16,32], index: 0, kind: input, shape index: {}]
  %s1 = inlined_call_operand.vmem [shape: bf16[32,128], index: 1, kind: input, shape index: {}]
  %s2 = inlined_call_operand.vmem [shape: f32[1,128], index: 2, kind: input, shape index: {}]
  %s3 = inlined_call_operand.vmem [shape: f32[16,128], index: 3, kind: input, shape index: {}]
  %s4 = inlined_call_operand.vmem [shape: f32[128,128], index: 4, kind: input, shape index: {}]
  %s5 = inlined_call_operand.vmem [shape: f32[1,128], index: 5, kind: input, shape index: {}]
  %s6 = inlined_call_operand.hbm [shape: f32[2,128], index: 6, kind: output, shape index: {}]
  %s7 = sld [smem:[#allocation0]]
  $region34: #{cnn_forward.1} parent=0
    _
  %s9 = ssub.s32 1, %s7
  %s10 = scalar_select 0, %s9, %s7
  $region1: #{cnn_forward.1} parent=0
    #allocation2 [shape = 'u8[1024]{0}', space=vmem, size = 0x400, scoped, tag = 'output window, operand 0, single buffered']
    #allocation3 [shape = 's32[1]{0}', space=sflag, size = 0x4, scoped, tag = 'scoped memory for cnn_forward.1']
    %11 = vsyncpa [#allocation3], 0
    // Predicated region
    $region2: #{cnn_forward.1} parent=1 // pred_check
      _
    $region3: #{cnn_forward.1} parent=1 // pred_check_branch
      %13 = sbr.rel (0) target = $region5
    $region4: #{cnn_forward.1} parent=1 // pred_region
      _
    $region5: #{cnn_forward.1} parent=1 // pred_fallthru
      _
    // Predicated region
    $region6: #{cnn_forward.1} parent=1 // pred_check
      _
    $region7: #{cnn_forward.1} parent=1 // pred_check_branch
      %15 = sbr.rel (0) target = $region9
    $region8: #{cnn_forward.1} parent=1 // pred_region
      _
    $region9: #{cnn_forward.1} parent=1 // pred_fallthru
      _
    // Predicated region
    $region10: #{cnn_forward.1} parent=1 // pred_check
      _
    $region11: #{cnn_forward.1} parent=1 // pred_check_branch
      %17 = sbr.rel (0) target = $region13
    $region12: #{cnn_forward.1} parent=1 // pred_region
      _
    $region13: #{cnn_forward.1} parent=1 // pred_fallthru
      _
    // Predicated region
    $region14: #{cnn_forward.1} parent=1 // pred_check
      _
    $region15: #{cnn_forward.1} parent=1 // pred_check_branch
      %19 = sbr.rel (0) target = $region17
    $region16: #{cnn_forward.1} parent=1 // pred_region
      _
    $region17: #{cnn_forward.1} parent=1 // pred_fallthru
      _
    // Predicated region
    $region18: #{cnn_forward.1} parent=1 // pred_check
      _
    $region19: #{cnn_forward.1} parent=1 // pred_check_branch
      %21 = sbr.rel (0) target = $region21
    $region20: #{cnn_forward.1} parent=1 // pred_region
      _
    $region21: #{cnn_forward.1} parent=1 // pred_fallthru
      _
    // Predicated region
    $region22: #{cnn_forward.1} parent=1 // pred_check
      _
    $region23: #{cnn_forward.1} parent=1 // pred_check_branch
      %23 = sbr.rel (0) target = $region25
    $region24: #{cnn_forward.1} parent=1 // pred_region
      _
    $region25: #{cnn_forward.1} parent=1 // pred_fallthru
      _
    %v25 = vld [vmem:[%s0] sm:$0xf]
    %v26 = vld [vmem:[%s0 + $0x4] sm:$0xf]
    %v27 = vld [vmem:[%s0 + $0x8] sm:$0xf]
    %v28 = vld [vmem:[%s0 + $0xc] sm:$0xf]
    %v29 = vld [vmem:[%s1] sm:$0xf]
    %v30 = vld [vmem:[%s1 + $0x4] sm:$0xf]
    %v31 = vld [vmem:[%s1 + $0x8] sm:$0xf]
    %v32 = vld [vmem:[%s1 + $0xc] sm:$0xf]
    %v37 = vunpack.c.l.b16 %v25
    %v38 = vunpack.c.l.b16 %v26
    %v39 = vunpack.c.l.b16 %v27
    %v40 = vunpack.c.l.b16 %v28
    %v41 = vpack.c.b16 %v38, %v37
    %v42 = vpack.c.b16 %v40, %v39
    %v47 = vunpack.c.l.b16 %v29
    %v48 = vunpack.c.l.b16 %v30
    %v49 = vunpack.c.l.b16 %v31
    %v50 = vunpack.c.l.b16 %v32
    %v51 = vpack.c.b16 %v48, %v47
    %v52 = vpack.c.b16 %v50, %v49
    %vm55 = vcmask 261120
    %v57 = vsel %vm55, %v41, 0
    %v60 = vsel %vm55, %v42, 0
    %62 = vmatprep.subr.bf16.mxu0 0
    %63 = vmatpush1.bf16.msra.mxu0 %v51
    %64 = vmatprep.subr.bf16.mxu0 0
    %65 = vmatpush1.bf16.msra.mxu0 %v52
    %66 = vmatprep.subr.bf16.mxu0 0
    %67 = vmatpush1.bf16.msra.mxu0 0
    %68 = vmatprep.subr.bf16.mxu0 0
    %69 = vmatpush1.bf16.msra.mxu0 0
    %70 = vmatprep.subr.bf16.mxu0 0
    %71 = vmatpush1.bf16.msra.mxu0 0
    %72 = vmatprep.subr.bf16.mxu0 0
    %73 = vmatpush1.bf16.msra.mxu0 0
    %74 = vmatprep.subr.bf16.mxu0 0
    %75 = vmatpush1.bf16.msra.mxu0 0
    %76 = vmatprep.subr.bf16.mxu0 0
    %77 = vmatpush1.bf16.msra.mxu0 0
    %78 = vmatprep.subr.bf16.mxu0 0
    %79 = vmatpush1.bf16.msra.mxu0 0
    %80 = vmatprep.subr.bf16.mxu0 0
    %81 = vmatpush1.bf16.msra.mxu0 0
    %82 = vmatprep.subr.bf16.mxu0 0
    %83 = vmatpush1.bf16.msra.mxu0 0
    %84 = vmatprep.subr.bf16.mxu0 0
    %85 = vmatpush1.bf16.msra.mxu0 0
    %86 = vmatprep.subr.bf16.mxu0 0
    %87 = vmatpush1.bf16.msra.mxu0 0
    %88 = vmatprep.subr.bf16.mxu0 0
    %89 = vmatpush1.bf16.msra.mxu0 0
    %90 = vmatprep.subr.bf16.mxu0 0
    %91 = vmatpush1.bf16.msra.mxu0 0
    %92 = vmatprep.subr.bf16.mxu0 0
    %93 = vmatpush1.bf16.msra.mxu0 0
    %94 = vmatprep.mubr.bf16.mxu0 0
    %95 = vmatmul.mubr.bf16.gmra.mrb[0].mxu0 %v57
    %v96 = vpop.f32.mrb[0].mxu0
    %v97 = vadd.f32 0.0, %v96
    %v98 = vpop.f32.mrb[0].mxu0
    %v99 = vpop.f32.mrb[0].mxu0
    %v100 = vadd.f32 0.0, %v99
    %v101 = vpop.f32.mrb[0].mxu0
    %102 = vmatprep.mubr.bf16.mxu0 0
    %103 = vmatmul.mubr.bf16.gmra.mrb[0].mxu0 %v60
    %v104 = vpop.f32.mrb[0].mxu0
    %v105 = vadd.f32 0.0, %v104
    %v106 = vpop.f32.mrb[0].mxu0
    %v107 = vpop.f32.mrb[0].mxu0
    %v108 = vadd.f32 0.0, %v107
    %v109 = vpop.f32.mrb[0].mxu0
    %110 = vdwg.mxu0
    %v111 = vrot.slane %v97, 1
    %v112 = vrot.slane %v100, 1
    %v113 = vrot.slane %v105, 1
    %v114 = vrot.slane %v108, 1
    %v115 = vlaneseq
    %v116 = vshrl.u32 %v115, 7
    %vm117 = vcmp.lt.s32.totalorder %v116, 7
    %v118 = vsel %vm117, %v113, %v114
    %v119 = vsel %vm117, %v112, %v113
    %v120 = vsel %vm117, %v111, %v112
    %v121 = vsel %vm117, %v114, %v111
    %122 = vrot.lane.b32.xlu0 %v120, 112
    %v123 = vpop.permute.xlu0 %122
    %124 = vrot.lane.b32.xlu0 %v119, 112
    %v125 = vpop.permute.xlu0 %124
    %126 = vrot.lane.b32.xlu0 %v118, 112
    %v127 = vpop.permute.xlu0 %126
    %128 = vrot.lane.b32.xlu0 %v121, 112
    %v129 = vpop.permute.xlu0 %128
    %v130 = vadd.f32 %v97, %v123
    %v131 = vadd.f32 %v100, %v125
    %v132 = vadd.f32 %v105, %v127
    %v133 = vadd.f32 %v108, %v129
    %v134 = vrot.slane %v97, 2
    %v135 = vrot.slane %v100, 2
    %v136 = vrot.slane %v105, 2
    %v137 = vrot.slane %v108, 2
    %vm138 = vcmp.lt.s32.totalorder %v116, 6
    %v139 = vsel %vm138, %v136, %v137
    %v140 = vsel %vm138, %v135, %v136
    %v141 = vsel %vm138, %v134, %v135
    %v142 = vsel %vm138, %v137, %v134
    %143 = vrot.lane.b32.xlu0 %v141, 96
    %v144 = vpop.permute.xlu0 %143
    %145 = vrot.lane.b32.xlu0 %v140, 96
    %v146 = vpop.permute.xlu0 %145
    %147 = vrot.lane.b32.xlu0 %v139, 96
    %v148 = vpop.permute.xlu0 %147
    %149 = vrot.lane.b32.xlu0 %v142, 96
    %v150 = vpop.permute.xlu0 %149
    %v151 = vadd.f32 %v130, %v144
    %v152 = vadd.f32 %v131, %v146
    %v153 = vadd.f32 %v132, %v148
    %v154 = vadd.f32 %v133, %v150
    %v155 = vrot.slane %v97, 3
    %v156 = vrot.slane %v100, 3
    %v157 = vrot.slane %v105, 3
    %v158 = vrot.slane %v108, 3
    %vm159 = vcmp.lt.s32.totalorder %v116, 5
    %v160 = vsel %vm159, %v157, %v158
    %v161 = vsel %vm159, %v156, %v157
    %v162 = vsel %vm159, %v155, %v156
    %v163 = vsel %vm159, %v158, %v155
    %164 = vrot.lane.b32.xlu0 %v162, 80
    %v165 = vpop.permute.xlu0 %164
    %166 = vrot.lane.b32.xlu0 %v161, 80
    %v167 = vpop.permute.xlu0 %166
    %168 = vrot.lane.b32.xlu0 %v160, 80
    %v169 = vpop.permute.xlu0 %168
    %170 = vrot.lane.b32.xlu0 %v163, 80
    %v171 = vpop.permute.xlu0 %170
    %v172 = vadd.f32 %v151, %v165
    %v173 = vadd.f32 %v152, %v167
    %v174 = vadd.f32 %v153, %v169
    %v175 = vadd.f32 %v154, %v171
    %v176 = vrot.slane %v97, 4
    %v177 = vrot.slane %v100, 4
    %v178 = vrot.slane %v105, 4
    %v179 = vrot.slane %v108, 4
    %vm180 = vcmp.lt.s32.totalorder %v116, 4
    %v181 = vsel %vm180, %v178, %v179
    %v182 = vsel %vm180, %v177, %v178
    %v183 = vsel %vm180, %v176, %v177
    %v184 = vsel %vm180, %v179, %v176
    %185 = vrot.lane.b32.xlu0 %v183, 64
    %v186 = vpop.permute.xlu0 %185
    %187 = vrot.lane.b32.xlu0 %v182, 64
    %v188 = vpop.permute.xlu0 %187
    %189 = vrot.lane.b32.xlu0 %v181, 64
    %v190 = vpop.permute.xlu0 %189
    %191 = vrot.lane.b32.xlu0 %v184, 64
    %v192 = vpop.permute.xlu0 %191
    %v193 = vadd.f32 %v172, %v186
    %v194 = vadd.f32 %v173, %v188
    %v195 = vadd.f32 %v174, %v190
    %v196 = vadd.f32 %v175, %v192
    %v197 = vld [vmem:[%s2] sm:$0x1]
    %v199 = vlaneseq
    %v200 = vshrl.u32 %v199, 7
    %v201 = vsub.s32 0, %v200
    %v202 = vrot.slane %v197, %v201
    %v204 = vadd.f32 %v193, %v202
    %v205 = vadd.f32 %v194, %v202
    %v206 = vadd.f32 %v195, %v202
    %v207 = vadd.f32 %v196, %v202
    %v208 = vmax.f32 %v204, 0.0
    %v209 = vmax.f32 %v205, 0.0
    %v210 = vmax.f32 %v206, 0.0
    %v211 = vmax.f32 %v207, 0.0
    %v212 = vld [vmem:[%s3] sm:$0xff]
    %v213 = vld [vmem:[%s3 + $0x8] sm:$0xff]
    %v214 = vmul.f32 %v208, %v212
    %v215 = vmul.f32 %v209, %v213
    %v216 = vmul.f32 %v210, %v212
    %v217 = vmul.f32 %v211, %v213
    %v218 = vmax.f32 %v214, %v215
    %v219 = vrot.slane %v218, 4
    %v220 = vmax.f32 %v218, %v219
    %v221 = vrot.slane %v220, 2
    %v222 = vmax.f32 %v220, %v221
    %v223 = vrot.slane %v222, 1
    %v224 = vmax.f32 %v222, %v223
    %v225 = vmax.f32 %v216, %v217
    %v226 = vrot.slane %v225, 4
    %v227 = vmax.f32 %v225, %v226
    %v228 = vrot.slane %v227, 2
    %v229 = vmax.f32 %v227, %v228
    %v230 = vrot.slane %v229, 1
    %v231 = vmax.f32 %v229, %v230
    %v232 = vld [vmem:[%s4] sm:$0xff]
    %v233 = vld [vmem:[%s4 + $0x8] sm:$0xff]
    %v234 = vld [vmem:[%s4 + $0x10] sm:$0xff]
    %v235 = vld [vmem:[%s4 + $0x18] sm:$0xff]
    %v236 = vld [vmem:[%s4 + $0x20] sm:$0xff]
    %v237 = vld [vmem:[%s4 + $0x28] sm:$0xff]
    %v238 = vld [vmem:[%s4 + $0x30] sm:$0xff]
    %v239 = vld [vmem:[%s4 + $0x38] sm:$0xff]
    %v240 = vld [vmem:[%s4 + $0x40] sm:$0xff]
    %v241 = vld [vmem:[%s4 + $0x48] sm:$0xff]
    %v242 = vld [vmem:[%s4 + $0x50] sm:$0xff]
    %v243 = vld [vmem:[%s4 + $0x58] sm:$0xff]
    %v244 = vld [vmem:[%s4 + $0x60] sm:$0xff]
    %v245 = vld [vmem:[%s4 + $0x68] sm:$0xff]
    %v246 = vld [vmem:[%s4 + $0x70] sm:$0xff]
    %v247 = vld [vmem:[%s4 + $0x78] sm:$0xff]
    %v248 = vld [vmem:[%s5] sm:$0x1]
    %v250 = vlaneseq
    %v251 = vshrl.u32 %v250, 7
    %v252 = vsub.s32 0, %v251
    %v253 = vrot.slane %v248, %v252
    %vm257 = vcmask 1041409
    %v258 = vsel %vm257, %v231, %v224
    %260 = vmatprep.subr.mxu0 0.0
    %261 = vmatpush1.msra.mxu0 %v232
    %262 = vmatprep.subr.mxu0 0.0
    %263 = vmatpush1.msra.mxu0 %v233
    %264 = vmatprep.subr.mxu0 0.0
    %265 = vmatpush1.msra.mxu0 %v234
    %266 = vmatprep.subr.mxu0 0.0
    %267 = vmatpush1.msra.mxu0 %v235
    %268 = vmatprep.subr.mxu0 0.0
    %269 = vmatpush1.msra.mxu0 %v236
    %270 = vmatprep.subr.mxu0 0.0
    %271 = vmatpush1.msra.mxu0 %v237
    %272 = vmatprep.subr.mxu0 0.0
    %273 = vmatpush1.msra.mxu0 %v238
    %274 = vmatprep.subr.mxu0 0.0
    %275 = vmatpush1.msra.mxu0 %v239
    %276 = vmatprep.subr.mxu0 0.0
    %277 = vmatpush1.msra.mxu0 %v240
    %278 = vmatprep.subr.mxu0 0.0
    %279 = vmatpush1.msra.mxu0 %v241
    %280 = vmatprep.subr.mxu0 0.0
    %281 = vmatpush1.msra.mxu0 %v242
    %282 = vmatprep.subr.mxu0 0.0
    %283 = vmatpush1.msra.mxu0 %v243
    %284 = vmatprep.subr.mxu0 0.0
    %285 = vmatpush1.msra.mxu0 %v244
    %286 = vmatprep.subr.mxu0 0.0
    %287 = vmatpush1.msra.mxu0 %v245
    %288 = vmatprep.subr.mxu0 0.0
    %289 = vmatpush1.msra.mxu0 %v246
    %290 = vmatprep.subr.mxu0 0.0
    %291 = vmatpush1.msra.mxu0 %v247
    %292 = vmatprep.subr.mxu0 0.0
    %293 = vmatpush1.msra.mxu0 0.0
    %294 = vmatprep.subr.mxu0 0.0
    %295 = vmatpush1.msra.mxu0 0.0
    %296 = vmatprep.subr.mxu0 0.0
    %297 = vmatpush1.msra.mxu0 0.0
    %298 = vmatprep.subr.mxu0 0.0
    %299 = vmatpush1.msra.mxu0 0.0
    %300 = vmatprep.subr.mxu0 0.0
    %301 = vmatpush1.msra.mxu0 0.0
    %302 = vmatprep.subr.mxu0 0.0
    %303 = vmatpush1.msra.mxu0 0.0
    %304 = vmatprep.subr.mxu0 0.0
    %305 = vmatpush1.msra.mxu0 0.0
    %306 = vmatprep.subr.mxu0 0.0
    %307 = vmatpush1.msra.mxu0 0.0
    %308 = vmatprep.subr.mxu0 0.0
    %309 = vmatpush1.msra.mxu0 0.0
    %310 = vmatprep.subr.mxu0 0.0
    %311 = vmatpush1.msra.mxu0 0.0
    %312 = vmatprep.subr.mxu0 0.0
    %313 = vmatpush1.msra.mxu0 0.0
    %314 = vmatprep.subr.mxu0 0.0
    %315 = vmatpush1.msra.mxu0 0.0
    %316 = vmatprep.subr.mxu0 0.0
    %317 = vmatpush1.msra.mxu0 0.0
    %318 = vmatprep.subr.mxu0 0.0
    %319 = vmatpush1.msra.mxu0 0.0
    %320 = vmatprep.subr.mxu0 0.0
    %321 = vmatpush1.msra.mxu0 0.0
    %322 = vmatprep.subr.mxu0 0.0
    %323 = vmatpush1.msra.mxu0 0.0
    %324 = vmatprep.mubr.f32.mxu0 0.0
    %325 = vmatmul.mubr.f32.gmra.mrb[0].mxu0 %v258
    %v326 = vpop.f32.mrb[0].mxu0
    %v327 = vadd.f32 %v253, %v326
    %v328 = vpop.f32.mrb[0].mxu0
    %329 = vdwg.mxu0
    %330 = vst [vmem:[#allocation2] sm:$0x3] %v327
    // Predicated region
    $region26: #{cnn_forward.1} parent=1 // pred_check
      _
    $region27: #{cnn_forward.1} parent=1 // pred_check_branch
      %332 = sbr.rel (0) target = $region29
    $region28: #{cnn_forward.1} parent=1 // pred_region
      %s334 = ssub.s32 32, 32
      %335 = vsyncadd [#allocation3], %s334
      %s337 = sshll.u32 [#allocation2], 4
      %s338 = int_to_ptr.vmem [resolvable:$true] %s337
      %340 = dma.vmem_to_hbm [thread:$0]  %s338, 32, %s6, [#allocation3]
    $region29: #{cnn_forward.1} parent=1 // pred_fallthru
      _
    // Predicated region
    $region30: #{cnn_forward.1} parent=1 // pred_check
      _
    $region31: #{cnn_forward.1} parent=1 // pred_check_branch
      %342 = sbr.rel (0) target = $region33
    $region32: #{cnn_forward.1} parent=1 // pred_region
      %343 = dma.done [#allocation3], 32
    $region33: #{cnn_forward.1} parent=1 // pred_fallthru
      _
    %344 = vsyncpa [#allocation3], 1

</llo_original>
